<compile_context>
chip_gen: v7x
topology: tpu7x:2x2x1
jax: 0.10.0
libtpu: 0.0.40
codegen_flags: <defaults>
</compile_context>

<pallas_src>
import functools

import jax
import jax.numpy as jnp
from jax.experimental import pallas as pl
from jax.experimental.pallas import tpu as pltpu


def _shortcut_kernel(x_ref, s_ref, o_ref, *, chan_pad, C, W, Ho, Wo, h_packed):
    # x_ref: (nb, C, Hq, Wq)   s_ref: (W, Wo)   o_ref: (nb, C + 2*chan_pad, Ho, Wo)
    #   h_packed=True  -> Hq = Ho, Wq = 2*W (even H; even row = first W lanes)
    #   h_packed=False -> Hq = H,  Wq = W   (odd H; sublane-strided even-row load)
    nb = o_ref.shape[0]

    # Zero only the channel-pad slices (each output element written exactly once).
    if chan_pad > 0:
        zeros = jnp.zeros((nb, chan_pad, Ho, Wo), o_ref.dtype)
        o_ref[:, :chan_pad, :, :] = zeros
        o_ref[:, chan_pad + C:, :, :] = zeros

    # Even-H rows of this block.
    if h_packed:
        xe = x_ref[:, :, :, :W]                       # (nb, C, Ho, W), contiguous slice
    else:
        xe = x_ref[:, :, pl.ds(0, Ho, stride=2), :]   # (nb, C, Ho, W), sublane stride 2

    # One fused one-hot selection matmul on the MXU: (nb*C*Ho, W) @ (W, Wo).
    # HIGHEST precision keeps the f32 gather bit-exact (one 1.0 per column).
    lhs = xe.reshape(nb * C * Ho, W)
    sub = jnp.dot(lhs, s_ref[...],
                  precision=jax.lax.Precision.HIGHEST,
                  preferred_element_type=jnp.float32)
    o_ref[:, chan_pad:chan_pad + C, :, :] = (
        sub.reshape(nb, C, Ho, Wo).astype(o_ref.dtype))


def _round_up(a, b):
    return -(-a // b) * b


def _largest_divisor_leq(n, cap):
    for d in range(min(n, cap), 0, -1):
        if n % d == 0:
            return d
    return 1


def lambda_layer(x, chan_pad=None):
    """Pallas TPU implementation of LambdaLayer's canonical downsample +
    channel-zero-pad shortcut lambda."""
    # TODO(synk): integer input dtypes would need a non-MXU gather path (v7x MXU
    # has no int support); this implementation targets float inputs.
    N, C, H, W = x.shape
    if chan_pad is None:
        chan_pad = C // 2                 # 'option A' shortcut default
    Ho, Wo = (H + 1) // 2, (W + 1) // 2   # matches PyTorch ::2 (ceil) for odd sizes
    C_out = C + 2 * chan_pad

    # Tiny one-hot column-selection matrix: S[2j, j] = 1.  (W, Wo) ~ <1 KiB.
    sel = (jnp.arange(W, dtype=jnp.int32)[:, None]
           == 2 * jnp.arange(Wo, dtype=jnp.int32)[None, :]).astype(x.dtype)

    # Free contiguous view: for even H, pack row pairs so the H stride-2 subsample
    # becomes a plain lane slice inside the kernel.
    h_packed = (H % 2 == 0)
    if h_packed:
        x_in = x.reshape(N, C, Ho, 2 * W)
        Hq, Wq = Ho, 2 * W
    else:
        x_in = x
        Hq, Wq = H, W

    # Samples per grid step: target ~6 MiB of (sublane/lane-padded) in+out VMEM per
    # block (x2 for double-buffering stays under every generation's scoped-VMEM
    # default); force >=2 grid steps only on multi-TensorCore chips (v7x megacore).
    itemsize = jnp.dtype(x.dtype).itemsize
    per_sample = itemsize * (C * _round_up(Hq, 8) * _round_up(Wq, 128)
                             + C_out * _round_up(Ho, 8) * _round_up(Wo, 128))
    cap = max(1, min(N, (6 << 20) // max(per_sample, 1), 32))
    try:
        multi_core = "7" in jax.devices()[0].device_kind.lower()
    except Exception:  # pragma: no cover - perf heuristic only
        multi_core = False
    if multi_core and N >= 2:
        cap = min(cap, max(1, N // 2))
    nb = _largest_divisor_leq(N, cap)
    grid = (N // nb,)

    kernel = functools.partial(_shortcut_kernel, chan_pad=chan_pad, C=C, W=W,
                               Ho=Ho, Wo=Wo, h_packed=h_packed)

    # TODO(synk): the odd H rows are still DMA'd from HBM (then dropped by the lane
    # slice).  Skipping them needs a manual strided DMA (memory_space=pl.ANY +
    # pl.ds(..., stride=2) + P4 double-buffering); left on the auto-pipelined path
    # since W*itemsize rows sit near HBM burst granularity for CIFAR-sized maps.
    return pl.pallas_call(
        kernel,
        out_shape=jax.ShapeDtypeStruct((N, C_out, Ho, Wo), x.dtype),
        grid=grid,
        in_specs=[
            pl.BlockSpec((nb, C, Hq, Wq), lambda n: (n, 0, 0, 0)),
            pl.BlockSpec((W, Wo), lambda n: (0, 0)),   # constant tiny block
        ],
        out_specs=pl.BlockSpec((nb, C_out, Ho, Wo), lambda n: (n, 0, 0, 0)),
        compiler_params=pltpu.CompilerParams(
            dimension_semantics=("parallel",)),
    )(x_in, sel)


if __name__ == "__main__":
    key = jax.random.PRNGKey(0)
    x = jax.random.normal(key, (2, 4, 16, 16), dtype=jnp.float32)

    out = jax.block_until_ready(lambda_layer(x))

    # Pure-JAX reference for the same lambda.
    pad = x.shape[1] // 2
    ref = jnp.pad(x[:, :, ::2, ::2], ((0, 0), (pad, pad), (0, 0), (0, 0)))

    assert out.shape == ref.shape, (out.shape, ref.shape)
    assert out.dtype == ref.dtype
    assert jnp.array_equal(out, ref), "kernel output mismatch"
    print("KERNEL_OK")
</pallas_src>

<mosaic_0001>
module attributes {stable_mosaic.version = 11 : i64} {
  func.func @_shortcut_kernel(%arg0: i32, %arg1: memref<2x4x8x32xf32, #tpu.memory_space<vmem>>, %arg2: memref<16x8xf32, #tpu.memory_space<vmem>>, %arg3: memref<2x8x8x8xf32, #tpu.memory_space<vmem>>) attributes {dimension_semantics = [#tpu.dimension_semantics<parallel>], iteration_bounds = array<i64: 1>, scalar_prefetch = 0 : i64, scratch_operands = 0 : i64, tpu.core_type = #tpu.core_type<tc>, window_params = [{transform_indices = @transform_0, window_bounds = array<i64: 2, 4, 8, 32>}, {pipeline_mode = #tpu.pipeline_mode<synchronous>, transform_indices = @transform_1, window_bounds = array<i64: 16, 8>}, {transform_indices = @transform_2, window_bounds = array<i64: 2, 8, 8, 8>}]} {
    %cst = arith.constant 0.000000e+00 : f32
    %0 = vector.broadcast %cst : f32 to vector<2x2x8x8xf32>
    %c0 = arith.constant 0 : index
    %c0_0 = arith.constant 0 : index
    %c0_1 = arith.constant 0 : index
    %c0_2 = arith.constant 0 : index
    %1 = vector.load %arg3[%c0, %c0_0, %c0_1, %c0_2] : memref<2x8x8x8xf32, #tpu.memory_space<vmem>>, vector<2x2x8x8xf32>
    tpu.vector_store %arg3[%c0, %c0_0, %c0_1, %c0_2], %0 {strides = array<i32>} : memref<2x8x8x8xf32, #tpu.memory_space<vmem>>, vector<2x2x8x8xf32>,
    %c0_3 = arith.constant 0 : index
    %c6 = arith.constant 6 : index
    %c0_4 = arith.constant 0 : index
    %c0_5 = arith.constant 0 : index
    %2 = vector.load %arg3[%c0_3, %c6, %c0_4, %c0_5] : memref<2x8x8x8xf32, #tpu.memory_space<vmem>>, vector<2x2x8x8xf32>
    tpu.vector_store %arg3[%c0_3, %c6, %c0_4, %c0_5], %0 {strides = array<i32>} : memref<2x8x8x8xf32, #tpu.memory_space<vmem>>, vector<2x2x8x8xf32>,
    %c0_6 = arith.constant 0 : index
    %c0_7 = arith.constant 0 : index
    %c0_8 = arith.constant 0 : index
    %c0_9 = arith.constant 0 : index
    %3 = vector.load %arg1[%c0_6, %c0_7, %c0_8, %c0_9] : memref<2x4x8x32xf32, #tpu.memory_space<vmem>>, vector<2x4x8x16xf32>
    %4 = vector.shape_cast %3 : vector<2x4x8x16xf32> to vector<64x16xf32>
    %c0_10 = arith.constant 0 : index
    %c0_11 = arith.constant 0 : index
    %5 = vector.load %arg2[%c0_10, %c0_11] : memref<16x8xf32, #tpu.memory_space<vmem>>, vector<16x8xf32>
    %cst_12 = arith.constant dense<0.000000e+00> : vector<64x8xf32>
    %6 = tpu.matmul %4, %5, %cst_12 {dimension_numbers = #tpu.dot_dimension_numbers<[1], [0], [0], [1], [0, 0, 1, 1], [], []>, precision = #tpu.contract_precision<fp32>} : vector<64x16xf32>, vector<16x8xf32>, vector<64x8xf32> -> vector<64x8xf32>
    %7 = vector.shape_cast %6 : vector<64x8xf32> to vector<2x4x8x8xf32>
    %c0_13 = arith.constant 0 : index
    %c2 = arith.constant 2 : index
    %c0_14 = arith.constant 0 : index
    %c0_15 = arith.constant 0 : index
    %8 = vector.load %arg3[%c0_13, %c2, %c0_14, %c0_15] : memref<2x8x8x8xf32, #tpu.memory_space<vmem>>, vector<2x4x8x8xf32>
    tpu.vector_store %arg3[%c0_13, %c2, %c0_14, %c0_15], %7 {strides = array<i32>} : memref<2x8x8x8xf32, #tpu.memory_space<vmem>>, vector<2x4x8x8xf32>,
    return
  }
  func.func @transform_0(%arg0: i32) -> (i32, i32, i32, i32) {
    %c0_i32 = arith.constant 0 : i32
    %c0_i32_0 = arith.constant 0 : i32
    %c0_i32_1 = arith.constant 0 : i32
    %c0_i32_2 = arith.constant 0 : i32
    return %arg0, %c0_i32, %c0_i32_0, %c0_i32_1 : i32, i32, i32, i32
  }
  func.func @transform_1(%arg0: i32) -> (i32, i32) {
    %c0_i32 = arith.constant 0 : i32
    %c0_i32_0 = arith.constant 0 : i32
    %c0_i32_1 = arith.constant 0 : i32
    return %c0_i32, %c0_i32_0 : i32, i32
  }
  func.func @transform_2(%arg0: i32) -> (i32, i32, i32, i32) {
    %c0_i32 = arith.constant 0 : i32
    %c0_i32_0 = arith.constant 0 : i32
    %c0_i32_1 = arith.constant 0 : i32
    %c0_i32_2 = arith.constant 0 : i32
    return %arg0, %c0_i32, %c0_i32_0, %c0_i32_1 : i32, i32, i32, i32
  }
}

</mosaic_0001>

<llo_original>
// kernel: tpu_custom_call.1
$region0: #{tpu_custom_call.1}
  #allocation0 [shape = 'u32[]', space=smem, size = 0x4, offset = 0x4, fixed_abs, tag = 'smem constant byte address 0x4 - core index']
  #allocation1 [shape = 'u32[144,128]{1,0:T(1,128)}', space=vmem, size = 0x12000, scoped, tag = 'internal scratch']
  %s0 = inlined_call_operand.hbm [shape: f32[2,4,8,32], index: 0, kind: input, shape index: {}]
  %s1 = inlined_call_operand.vmem [shape: f32[16,8], index: 1, kind: input, shape index: {}]
  %s2 = inlined_call_operand.hbm [shape: f32[2,8,8,8], index: 2, kind: output, shape index: {}]
  %s3 = sld [smem:[#allocation0]]
  $region22: #{tpu_custom_call.1} parent=0
    _
  %s5 = ssub.s32 1, %s3
  %s6 = scalar_select 0, %s5, %s3
  $region1: #{tpu_custom_call.1} parent=0
    #allocation2 [shape = 'u8[32768]{0}', space=vmem, size = 0x8000, scoped, tag = 'input window, operand 0, single buffered']
    #allocation3 [shape = 's32[1]{0}', space=sflag, size = 0x4, scoped, tag = 'scoped memory for tpu_custom_call.1']
    #allocation4 [shape = 's32[1]{0}', space=sflag, size = 0x4, scoped, tag = 'scoped memory for tpu_custom_call.1']
    #allocation5 [shape = 'u8[65536]{0}', space=vmem, size = 0x10000, scoped, tag = 'output window, operand 0, single buffered']
    %7 = vsyncpa [#allocation3], 0
    %8 = vsyncpa [#allocation4], 0
    // Predicated region
    $region2: #{tpu_custom_call.1} parent=1 // pred_check
      _
    $region3: #{tpu_custom_call.1} parent=1 // pred_check_branch
      %10 = sbr.rel (0) target = $region5
    $region4: #{tpu_custom_call.1} parent=1 // pred_region
      %s12 = ssub.s32 1024, 1024
      %13 = vsyncadd [#allocation3], %s12
      %s14 = sshll.u32 [#allocation2], 4
      %s15 = int_to_ptr.vmem [resolvable:$true] %s14
      %20 = dma.hbm_to_vmem [thread:$0]  %s0, 1024, %s15, [#allocation3], 128, 128, 8
    $region5: #{tpu_custom_call.1} parent=1 // pred_fallthru
      _
    // Predicated region
    $region6: #{tpu_custom_call.1} parent=1 // pred_check
      _
    $region7: #{tpu_custom_call.1} parent=1 // pred_check_branch
      %22 = sbr.rel (0) target = $region9
    $region8: #{tpu_custom_call.1} parent=1 // pred_region
      _
    $region9: #{tpu_custom_call.1} parent=1 // pred_fallthru
      _
    // Predicated region
    $region10: #{tpu_custom_call.1} parent=1 // pred_check
      _
    $region11: #{tpu_custom_call.1} parent=1 // pred_check_branch
      %24 = sbr.rel (0) target = $region13
    $region12: #{tpu_custom_call.1} parent=1 // pred_region
      %25 = dma.done [#allocation3], 1024
    $region13: #{tpu_custom_call.1} parent=1 // pred_fallthru
      _
    %vm26 = vcmask 64512
    %27 = vst.msk [vmem:[#allocation5] sm:$0xff] %vm26, 0.0
    %28 = vst.msk [vmem:[#allocation5 + $0x8] sm:$0xff] %vm26, 0.0
    %29 = vst.msk [vmem:[#allocation5 + $0x40] sm:$0xff] %vm26, 0.0
    %30 = vst.msk [vmem:[#allocation5 + $0x48] sm:$0xff] %vm26, 0.0
    %s31 = scalar_lea.vmem [#allocation5], 48
    %32 = vst.msk [vmem:[%s31] sm:$0xff] %vm26, 0.0
    %33 = vst.msk [vmem:[%s31 + $0x8] sm:$0xff] %vm26, 0.0
    %34 = vst.msk [vmem:[%s31 + $0x40] sm:$0xff] %vm26, 0.0
    %35 = vst.msk [vmem:[%s31 + $0x48] sm:$0xff] %vm26, 0.0
    %v36 = vld [vmem:[#allocation2] sm:$0xff]
    %v37 = vld [vmem:[#allocation2 + $0x8] sm:$0xff]
    %v38 = vld [vmem:[#allocation2 + $0x10] sm:$0xff]
    %v39 = vld [vmem:[#allocation2 + $0x18] sm:$0xff]
    %v40 = vld [vmem:[#allocation2 + $0x20] sm:$0xff]
    %v41 = vld [vmem:[#allocation2 + $0x28] sm:$0xff]
    %v42 = vld [vmem:[#allocation2 + $0x30] sm:$0xff]
    %v43 = vld [vmem:[#allocation2 + $0x38] sm:$0xff]
    %v44 = vld [vmem:[%s1] sm:$0xff]
    %v45 = vld [vmem:[%s1 + $0x8] sm:$0xff]
    %vm46 = vcmask 130048
    %v48 = vsel %vm46, %v36, 0
    %v51 = vsel %vm46, %v37, 0
    %v54 = vsel %vm46, %v38, 0
    %v57 = vsel %vm46, %v39, 0
    %v60 = vsel %vm46, %v40, 0
    %v63 = vsel %vm46, %v41, 0
    %v66 = vsel %vm46, %v42, 0
    %v69 = vsel %vm46, %v43, 0
    %71 = vmatprep.subr.mxu0 0.0
    %v72 = vand.u32 %v44, 4294901760
    %73 = vmatpush1.msra.mxu0 %v72
    %74 = vmatprep.subr.mxu0 0.0
    %v75 = vand.u32 %v45, 4294901760
    %76 = vmatpush1.msra.mxu0 %v75
    %77 = vmatprep.subr.mxu0 0.0
    %78 = vmatpush1.msra.mxu0 0.0
    %79 = vmatprep.subr.mxu0 0.0
    %80 = vmatpush1.msra.mxu0 0.0
    %81 = vmatprep.subr.mxu0 0.0
    %82 = vmatpush1.msra.mxu0 0.0
    %83 = vmatprep.subr.mxu0 0.0
    %84 = vmatpush1.msra.mxu0 0.0
    %85 = vmatprep.subr.mxu0 0.0
    %86 = vmatpush1.msra.mxu0 0.0
    %87 = vmatprep.subr.mxu0 0.0
    %88 = vmatpush1.msra.mxu0 0.0
    %89 = vmatprep.subr.mxu0 0.0
    %90 = vmatpush1.msra.mxu0 0.0
    %91 = vmatprep.subr.mxu0 0.0
    %92 = vmatpush1.msra.mxu0 0.0
    %93 = vmatprep.subr.mxu0 0.0
    %94 = vmatpush1.msra.mxu0 0.0
    %95 = vmatprep.subr.mxu0 0.0
    %96 = vmatpush1.msra.mxu0 0.0
    %97 = vmatprep.subr.mxu0 0.0
    %98 = vmatpush1.msra.mxu0 0.0
    %99 = vmatprep.subr.mxu0 0.0
    %100 = vmatpush1.msra.mxu0 0.0
    %101 = vmatprep.subr.mxu0 0.0
    %102 = vmatpush1.msra.mxu0 0.0
    %103 = vmatprep.subr.mxu0 0.0
    %104 = vmatpush1.msra.mxu0 0.0
    %105 = vmatprep.subr.mxu0 0.0
    %106 = vmatpush1.msra.mxu0 0.0
    %107 = vmatprep.subr.mxu0 0.0
    %108 = vmatpush1.msra.mxu0 0.0
    %109 = vmatprep.subr.mxu0 0.0
    %110 = vmatpush1.msra.mxu0 0.0
    %111 = vmatprep.subr.mxu0 0.0
    %112 = vmatpush1.msra.mxu0 0.0
    %113 = vmatprep.subr.mxu0 0.0
    %114 = vmatpush1.msra.mxu0 0.0
    %115 = vmatprep.subr.mxu0 0.0
    %116 = vmatpush1.msra.mxu0 0.0
    %117 = vmatprep.subr.mxu0 0.0
    %118 = vmatpush1.msra.mxu0 0.0
    %119 = vmatprep.subr.mxu0 0.0
    %120 = vmatpush1.msra.mxu0 0.0
    %121 = vmatprep.subr.mxu0 0.0
    %122 = vmatpush1.msra.mxu0 0.0
    %123 = vmatprep.subr.mxu0 0.0
    %124 = vmatpush1.msra.mxu0 0.0
    %125 = vmatprep.subr.mxu0 0.0
    %126 = vmatpush1.msra.mxu0 0.0
    %127 = vmatprep.subr.mxu0 0.0
    %128 = vmatpush1.msra.mxu0 0.0
    %129 = vmatprep.subr.mxu0 0.0
    %130 = vmatpush1.msra.mxu0 0.0
    %131 = vmatprep.subr.mxu0 0.0
    %132 = vmatpush1.msra.mxu0 0.0
    %133 = vmatprep.subr.mxu0 0.0
    %134 = vmatpush1.msra.mxu0 0.0
    %135 = vmatprep.subr.mxu0 0.0
    %136 = vmatpush1.msra.mxu0 0.0
    %137 = vmatprep.mubr.f32.mxu0 0.0
    %v138 = vand.u32 %v48, 4294901760
    %v139 = vsub.f32 %v48, %v138
    %v140 = vand.u32 %v139, 4294901760
    %v141 = vsub.f32 %v139, %v140
    %v142 = vand.u32 %v141, 4294901760
    %143 = vmatmul.mubr.f32.gmra.mrb[0].mxu0 %v142
    %v144 = vpop.f32.mrb[0].mxu0
    %v145 = vadd.f32 0.0, %v144
    %v146 = vpop.f32.mrb[0].mxu0
    %147 = vmatprep.mubr.f32.mxu0 0.0
    %v148 = vand.u32 %v51, 4294901760
    %v149 = vsub.f32 %v51, %v148
    %v150 = vand.u32 %v149, 4294901760
    %v151 = vsub.f32 %v149, %v150
    %v152 = vand.u32 %v151, 4294901760
    %153 = vmatmul.mubr.f32.gmra.mrb[0].mxu0 %v152
    %v154 = vpop.f32.mrb[0].mxu0
    %v155 = vadd.f32 0.0, %v154
    %v156 = vpop.f32.mrb[0].mxu0
    %157 = vmatprep.mubr.f32.mxu0 0.0
    %v158 = vand.u32 %v54, 4294901760
    %v159 = vsub.f32 %v54, %v158
    %v160 = vand.u32 %v159, 4294901760
    %v161 = vsub.f32 %v159, %v160
    %v162 = vand.u32 %v161, 4294901760
    %163 = vmatmul.mubr.f32.gmra.mrb[0].mxu0 %v162
    %v164 = vpop.f32.mrb[0].mxu0
    %v165 = vadd.f32 0.0, %v164
    %v166 = vpop.f32.mrb[0].mxu0
    %167 = vmatprep.mubr.f32.mxu0 0.0
    %v168 = vand.u32 %v57, 4294901760
    %v169 = vsub.f32 %v57, %v168
    %v170 = vand.u32 %v169, 4294901760
    %v171 = vsub.f32 %v169, %v170
    %v172 = vand.u32 %v171, 4294901760
    %173 = vmatmul.mubr.f32.gmra.mrb[0].mxu0 %v172
    %v174 = vpop.f32.mrb[0].mxu0
    %v175 = vadd.f32 0.0, %v174
    %v176 = vpop.f32.mrb[0].mxu0
    %177 = vmatprep.mubr.f32.mxu0 0.0
    %v178 = vand.u32 %v60, 4294901760
    %v179 = vsub.f32 %v60, %v178
    %v180 = vand.u32 %v179, 4294901760
    %v181 = vsub.f32 %v179, %v180
    %v182 = vand.u32 %v181, 4294901760
    %183 = vmatmul.mubr.f32.gmra.mrb[0].mxu0 %v182
    %v184 = vpop.f32.mrb[0].mxu0
    %v185 = vadd.f32 0.0, %v184
    %v186 = vpop.f32.mrb[0].mxu0
    %187 = vmatprep.mubr.f32.mxu0 0.0
    %v188 = vand.u32 %v63, 4294901760
    %v189 = vsub.f32 %v63, %v188
    %v190 = vand.u32 %v189, 4294901760
    %v191 = vsub.f32 %v189, %v190
    %v192 = vand.u32 %v191, 4294901760
    %193 = vmatmul.mubr.f32.gmra.mrb[0].mxu0 %v192
    %v194 = vpop.f32.mrb[0].mxu0
    %v195 = vadd.f32 0.0, %v194
    %v196 = vpop.f32.mrb[0].mxu0
    %197 = vmatprep.mubr.f32.mxu0 0.0
    %v198 = vand.u32 %v66, 4294901760
    %v199 = vsub.f32 %v66, %v198
    %v200 = vand.u32 %v199, 4294901760
    %v201 = vsub.f32 %v199, %v200
    %v202 = vand.u32 %v201, 4294901760
    %203 = vmatmul.mubr.f32.gmra.mrb[0].mxu0 %v202
    %v204 = vpop.f32.mrb[0].mxu0
    %v205 = vadd.f32 0.0, %v204
    %v206 = vpop.f32.mrb[0].mxu0
    %207 = vmatprep.mubr.f32.mxu0 0.0
    %v208 = vand.u32 %v69, 4294901760
    %v209 = vsub.f32 %v69, %v208
    %v210 = vand.u32 %v209, 4294901760
    %v211 = vsub.f32 %v209, %v210
    %v212 = vand.u32 %v211, 4294901760
    %213 = vmatmul.mubr.f32.gmra.mrb[0].mxu0 %v212
    %v214 = vpop.f32.mrb[0].mxu0
    %v215 = vadd.f32 0.0, %v214
    %v216 = vpop.f32.mrb[0].mxu0
    %217 = vdwg.mxu0
    %218 = vmatprep.subr.mxu0 0.0
    %v219 = vand.u32 %v44, 4294901760
    %v220 = vsub.f32 %v44, %v219
    %v221 = vand.u32 %v220, 4294901760
    %v222 = vsub.f32 %v220, %v221
    %v223 = vand.u32 %v222, 4294901760
    %224 = vmatpush1.msra.mxu0 %v223
    %225 = vmatprep.subr.mxu0 0.0
    %v226 = vand.u32 %v45, 4294901760
    %v227 = vsub.f32 %v45, %v226
    %v228 = vand.u32 %v227, 4294901760
    %v229 = vsub.f32 %v227, %v228
    %v230 = vand.u32 %v229, 4294901760
    %231 = vmatpush1.msra.mxu0 %v230
    %232 = vmatprep.subr.mxu0 0.0
    %233 = vmatpush1.msra.mxu0 0.0
    %234 = vmatprep.subr.mxu0 0.0
    %235 = vmatpush1.msra.mxu0 0.0
    %236 = vmatprep.subr.mxu0 0.0
    %237 = vmatpush1.msra.mxu0 0.0
    %238 = vmatprep.subr.mxu0 0.0
    %239 = vmatpush1.msra.mxu0 0.0
    %240 = vmatprep.subr.mxu0 0.0
    %241 = vmatpush1.msra.mxu0 0.0
    %242 = vmatprep.subr.mxu0 0.0
    %243 = vmatpush1.msra.mxu0 0.0
    %244 = vmatprep.subr.mxu0 0.0
    %245 = vmatpush1.msra.mxu0 0.0
    %246 = vmatprep.subr.mxu0 0.0
    %247 = vmatpush1.msra.mxu0 0.0
    %248 = vmatprep.subr.mxu0 0.0
    %249 = vmatpush1.msra.mxu0 0.0
    %250 = vmatprep.subr.mxu0 0.0
    %251 = vmatpush1.msra.mxu0 0.0
    %252 = vmatprep.subr.mxu0 0.0
    %253 = vmatpush1.msra.mxu0 0.0
    %254 = vmatprep.subr.mxu0 0.0
    %255 = vmatpush1.msra.mxu0 0.0
    %256 = vmatprep.subr.mxu0 0.0
    %257 = vmatpush1.msra.mxu0 0.0
    %258 = vmatprep.subr.mxu0 0.0
    %259 = vmatpush1.msra.mxu0 0.0
    %260 = vmatprep.subr.mxu0 0.0
    %261 = vmatpush1.msra.mxu0 0.0
    %262 = vmatprep.subr.mxu0 0.0
    %263 = vmatpush1.msra.mxu0 0.0
    %264 = vmatprep.subr.mxu0 0.0
    %265 = vmatpush1.msra.mxu0 0.0
    %266 = vmatprep.subr.mxu0 0.0
    %267 = vmatpush1.msra.mxu0 0.0
    %268 = vmatprep.subr.mxu0 0.0
    %269 = vmatpush1.msra.mxu0 0.0
    %270 = vmatprep.subr.mxu0 0.0
    %271 = vmatpush1.msra.mxu0 0.0
    %272 = vmatprep.subr.mxu0 0.0
    %273 = vmatpush1.msra.mxu0 0.0
    %274 = vmatprep.subr.mxu0 0.0
    %275 = vmatpush1.msra.mxu0 0.0
    %276 = vmatprep.subr.mxu0 0.0
    %277 = vmatpush1.msra.mxu0 0.0
    %278 = vmatprep.subr.mxu0 0.0
    %279 = vmatpush1.msra.mxu0 0.0
    %280 = vmatprep.subr.mxu0 0.0
    %281 = vmatpush1.msra.mxu0 0.0
    %282 = vmatprep.subr.mxu0 0.0
    %283 = vmatpush1.msra.mxu0 0.0
    %284 = vmatprep.subr.mxu0 0.0
    %285 = vmatpush1.msra.mxu0 0.0
    %286 = vmatprep.subr.mxu0 0.0
    %287 = vmatpush1.msra.mxu0 0.0
    %288 = vmatprep.subr.mxu0 0.0
    %289 = vmatpush1.msra.mxu0 0.0
    %290 = vmatprep.subr.mxu0 0.0
    %291 = vmatpush1.msra.mxu0 0.0
    %292 = vmatprep.mubr.f32.mxu0 0.0
    %v293 = vand.u32 %v48, 4294901760
    %294 = vmatmul.mubr.f32.gmra.mrb[0].mxu0 %v293
    %v295 = vpop.f32.mrb[0].mxu0
    %v296 = vadd.f32 %v145, %v295
    %v297 = vpop.f32.mrb[0].mxu0
    %298 = vmatprep.mubr.f32.mxu0 0.0
    %v299 = vand.u32 %v51, 4294901760
    %300 = vmatmul.mubr.f32.gmra.mrb[0].mxu0 %v299
    %v301 = vpop.f32.mrb[0].mxu0
    %v302 = vadd.f32 %v155, %v301
    %v303 = vpop.f32.mrb[0].mxu0
    %304 = vmatprep.mubr.f32.mxu0 0.0
    %v305 = vand.u32 %v54, 4294901760
    %306 = vmatmul.mubr.f32.gmra.mrb[0].mxu0 %v305
    %v307 = vpop.f32.mrb[0].mxu0
    %v308 = vadd.f32 %v165, %v307
    %v309 = vpop.f32.mrb[0].mxu0
    %310 = vmatprep.mubr.f32.mxu0 0.0
    %v311 = vand.u32 %v57, 4294901760
    %312 = vmatmul.mubr.f32.gmra.mrb[0].mxu0 %v311
    %v313 = vpop.f32.mrb[0].mxu0
    %v314 = vadd.f32 %v175, %v313
    %v315 = vpop.f32.mrb[0].mxu0
    %316 = vmatprep.mubr.f32.mxu0 0.0
    %v317 = vand.u32 %v60, 4294901760
    %318 = vmatmul.mubr.f32.gmra.mrb[0].mxu0 %v317
    %v319 = vpop.f32.mrb[0].mxu0
    %v320 = vadd.f32 %v185, %v319
    %v321 = vpop.f32.mrb[0].mxu0
    %322 = vmatprep.mubr.f32.mxu0 0.0
    %v323 = vand.u32 %v63, 4294901760
    %324 = vmatmul.mubr.f32.gmra.mrb[0].mxu0 %v323
    %v325 = vpop.f32.mrb[0].mxu0
    %v326 = vadd.f32 %v195, %v325
    %v327 = vpop.f32.mrb[0].mxu0
    %328 = vmatprep.mubr.f32.mxu0 0.0
    %v329 = vand.u32 %v66, 4294901760
    %330 = vmatmul.mubr.f32.gmra.mrb[0].mxu0 %v329
    %v331 = vpop.f32.mrb[0].mxu0
    %v332 = vadd.f32 %v205, %v331
    %v333 = vpop.f32.mrb[0].mxu0
    %334 = vmatprep.mubr.f32.mxu0 0.0
    %v335 = vand.u32 %v69, 4294901760
    %336 = vmatmul.mubr.f32.gmra.mrb[0].mxu0 %v335
    %v337 = vpop.f32.mrb[0].mxu0
    %v338 = vadd.f32 %v215, %v337
    %v339 = vpop.f32.mrb[0].mxu0
    %340 = vdwg.mxu0
    %341 = vmatprep.subr.mxu0 0.0
    %v342 = vand.u32 %v44, 4294901760
    %v343 = vsub.f32 %v44, %v342
    %344 = vmatpush1.msra.mxu0 %v343
    %345 = vmatprep.subr.mxu0 0.0
    %v346 = vand.u32 %v45, 4294901760
    %v347 = vsub.f32 %v45, %v346
    %348 = vmatpush1.msra.mxu0 %v347
    %349 = vmatprep.subr.mxu0 0.0
    %350 = vmatpush1.msra.mxu0 0.0
    %351 = vmatprep.subr.mxu0 0.0
    %352 = vmatpush1.msra.mxu0 0.0
    %353 = vmatprep.subr.mxu0 0.0
    %354 = vmatpush1.msra.mxu0 0.0
    %355 = vmatprep.subr.mxu0 0.0
    %356 = vmatpush1.msra.mxu0 0.0
    %357 = vmatprep.subr.mxu0 0.0
    %358 = vmatpush1.msra.mxu0 0.0
    %359 = vmatprep.subr.mxu0 0.0
    %360 = vmatpush1.msra.mxu0 0.0
    %361 = vmatprep.subr.mxu0 0.0
    %362 = vmatpush1.msra.mxu0 0.0
    %363 = vmatprep.subr.mxu0 0.0
    %364 = vmatpush1.msra.mxu0 0.0
    %365 = vmatprep.subr.mxu0 0.0
    %366 = vmatpush1.msra.mxu0 0.0
    %367 = vmatprep.subr.mxu0 0.0
    %368 = vmatpush1.msra.mxu0 0.0
    %369 = vmatprep.subr.mxu0 0.0
    %370 = vmatpush1.msra.mxu0 0.0
    %371 = vmatprep.subr.mxu0 0.0
    %372 = vmatpush1.msra.mxu0 0.0
    %373 = vmatprep.subr.mxu0 0.0
    %374 = vmatpush1.msra.mxu0 0.0
    %375 = vmatprep.subr.mxu0 0.0
    %376 = vmatpush1.msra.mxu0 0.0
    %377 = vmatprep.subr.mxu0 0.0
    %378 = vmatpush1.msra.mxu0 0.0
    %379 = vmatprep.subr.mxu0 0.0
    %380 = vmatpush1.msra.mxu0 0.0
    %381 = vmatprep.subr.mxu0 0.0
    %382 = vmatpush1.msra.mxu0 0.0
    %383 = vmatprep.subr.mxu0 0.0
    %384 = vmatpush1.msra.mxu0 0.0
    %385 = vmatprep.subr.mxu0 0.0
    %386 = vmatpush1.msra.mxu0 0.0
    %387 = vmatprep.subr.mxu0 0.0
    %388 = vmatpush1.msra.mxu0 0.0
    %389 = vmatprep.subr.mxu0 0.0
    %390 = vmatpush1.msra.mxu0 0.0
    %391 = vmatprep.subr.mxu0 0.0
    %392 = vmatpush1.msra.mxu0 0.0
    %393 = vmatprep.subr.mxu0 0.0
    %394 = vmatpush1.msra.mxu0 0.0
    %395 = vmatprep.subr.mxu0 0.0
    %396 = vmatpush1.msra.mxu0 0.0
    %397 = vmatprep.subr.mxu0 0.0
    %398 = vmatpush1.msra.mxu0 0.0
    %399 = vmatprep.subr.mxu0 0.0
    %400 = vmatpush1.msra.mxu0 0.0
    %401 = vmatprep.subr.mxu0 0.0
    %402 = vmatpush1.msra.mxu0 0.0
    %403 = vmatprep.subr.mxu0 0.0
    %404 = vmatpush1.msra.mxu0 0.0
    %405 = vmatprep.subr.mxu0 0.0
    %406 = vmatpush1.msra.mxu0 0.0
    %407 = vmatprep.subr.mxu0 0.0
    %408 = vmatpush1.msra.mxu0 0.0
    %409 = vmatprep.mubr.f32.mxu0 0.0
    %v410 = vand.u32 %v48, 4294901760
    %v411 = vsub.f32 %v48, %v410
    %412 = vmatmul.mubr.f32.gmra.mrb[0].mxu0 %v411
    %v413 = vpop.f32.mrb[0].mxu0
    %v414 = vadd.f32 %v296, %v413
    %v415 = vpop.f32.mrb[0].mxu0
    %416 = vmatprep.mubr.f32.mxu0 0.0
    %v417 = vand.u32 %v51, 4294901760
    %v418 = vsub.f32 %v51, %v417
    %419 = vmatmul.mubr.f32.gmra.mrb[0].mxu0 %v418
    %v420 = vpop.f32.mrb[0].mxu0
    %v421 = vadd.f32 %v302, %v420
    %v422 = vpop.f32.mrb[0].mxu0
    %423 = vmatprep.mubr.f32.mxu0 0.0
    %v424 = vand.u32 %v54, 4294901760
    %v425 = vsub.f32 %v54, %v424
    %426 = vmatmul.mubr.f32.gmra.mrb[0].mxu0 %v425
    %v427 = vpop.f32.mrb[0].mxu0
    %v428 = vadd.f32 %v308, %v427
    %v429 = vpop.f32.mrb[0].mxu0
    %430 = vmatprep.mubr.f32.mxu0 0.0
    %v431 = vand.u32 %v57, 4294901760
    %v432 = vsub.f32 %v57, %v431
    %433 = vmatmul.mubr.f32.gmra.mrb[0].mxu0 %v432
    %v434 = vpop.f32.mrb[0].mxu0
    %v435 = vadd.f32 %v314, %v434
    %v436 = vpop.f32.mrb[0].mxu0
    %437 = vmatprep.mubr.f32.mxu0 0.0
    %v438 = vand.u32 %v60, 4294901760
    %v439 = vsub.f32 %v60, %v438
    %440 = vmatmul.mubr.f32.gmra.mrb[0].mxu0 %v439
    %v441 = vpop.f32.mrb[0].mxu0
    %v442 = vadd.f32 %v320, %v441
    %v443 = vpop.f32.mrb[0].mxu0
    %444 = vmatprep.mubr.f32.mxu0 0.0
    %v445 = vand.u32 %v63, 4294901760
    %v446 = vsub.f32 %v63, %v445
    %447 = vmatmul.mubr.f32.gmra.mrb[0].mxu0 %v446
    %v448 = vpop.f32.mrb[0].mxu0
    %v449 = vadd.f32 %v326, %v448
    %v450 = vpop.f32.mrb[0].mxu0
    %451 = vmatprep.mubr.f32.mxu0 0.0
    %v452 = vand.u32 %v66, 4294901760
    %v453 = vsub.f32 %v66, %v452
    %454 = vmatmul.mubr.f32.gmra.mrb[0].mxu0 %v453
    %v455 = vpop.f32.mrb[0].mxu0
    %v456 = vadd.f32 %v332, %v455
    %v457 = vpop.f32.mrb[0].mxu0
    %458 = vmatprep.mubr.f32.mxu0 0.0
    %v459 = vand.u32 %v69, 4294901760
    %v460 = vsub.f32 %v69, %v459
    %461 = vmatmul.mubr.f32.gmra.mrb[0].mxu0 %v460
    %v462 = vpop.f32.mrb[0].mxu0
    %v463 = vadd.f32 %v338, %v462
    %v464 = vpop.f32.mrb[0].mxu0
    %465 = vdwg.mxu0
    %466 = vmatprep.subr.mxu0 0.0
    %v467 = vand.u32 %v44, 4294901760
    %468 = vmatpush1.msra.mxu0 %v467
    %469 = vmatprep.subr.mxu0 0.0
    %v470 = vand.u32 %v45, 4294901760
    %471 = vmatpush1.msra.mxu0 %v470
    %472 = vmatprep.subr.mxu0 0.0
    %473 = vmatpush1.msra.mxu0 0.0
    %474 = vmatprep.subr.mxu0 0.0
    %475 = vmatpush1.msra.mxu0 0.0
    %476 = vmatprep.subr.mxu0 0.0
    %477 = vmatpush1.msra.mxu0 0.0
    %478 = vmatprep.subr.mxu0 0.0
    %479 = vmatpush1.msra.mxu0 0.0
    %480 = vmatprep.subr.mxu0 0.0
    %481 = vmatpush1.msra.mxu0 0.0
    %482 = vmatprep.subr.mxu0 0.0
    %483 = vmatpush1.msra.mxu0 0.0
    %484 = vmatprep.subr.mxu0 0.0
    %485 = vmatpush1.msra.mxu0 0.0
    %486 = vmatprep.subr.mxu0 0.0
    %487 = vmatpush1.msra.mxu0 0.0
    %488 = vmatprep.subr.mxu0 0.0
    %489 = vmatpush1.msra.mxu0 0.0
    %490 = vmatprep.subr.mxu0 0.0
    %491 = vmatpush1.msra.mxu0 0.0
    %492 = vmatprep.subr.mxu0 0.0
    %493 = vmatpush1.msra.mxu0 0.0
    %494 = vmatprep.subr.mxu0 0.0
    %495 = vmatpush1.msra.mxu0 0.0
    %496 = vmatprep.subr.mxu0 0.0
    %497 = vmatpush1.msra.mxu0 0.0
    %498 = vmatprep.subr.mxu0 0.0
    %499 = vmatpush1.msra.mxu0 0.0
    %500 = vmatprep.subr.mxu0 0.0
    %501 = vmatpush1.msra.mxu0 0.0
    %502 = vmatprep.subr.mxu0 0.0
    %503 = vmatpush1.msra.mxu0 0.0
    %504 = vmatprep.subr.mxu0 0.0
    %505 = vmatpush1.msra.mxu0 0.0
    %506 = vmatprep.subr.mxu0 0.0
    %507 = vmatpush1.msra.mxu0 0.0
    %508 = vmatprep.subr.mxu0 0.0
    %509 = vmatpush1.msra.mxu0 0.0
    %510 = vmatprep.subr.mxu0 0.0
    %511 = vmatpush1.msra.mxu0 0.0
    %512 = vmatprep.subr.mxu0 0.0
    %513 = vmatpush1.msra.mxu0 0.0
    %514 = vmatprep.subr.mxu0 0.0
    %515 = vmatpush1.msra.mxu0 0.0
    %516 = vmatprep.subr.mxu0 0.0
    %517 = vmatpush1.msra.mxu0 0.0
    %518 = vmatprep.subr.mxu0 0.0
    %519 = vmatpush1.msra.mxu0 0.0
    %520 = vmatprep.subr.mxu0 0.0
    %521 = vmatpush1.msra.mxu0 0.0
    %522 = vmatprep.subr.mxu0 0.0
    %523 = vmatpush1.msra.mxu0 0.0
    %524 = vmatprep.subr.mxu0 0.0
    %525 = vmatpush1.msra.mxu0 0.0
    %526 = vmatprep.subr.mxu0 0.0
    %527 = vmatpush1.msra.mxu0 0.0
    %528 = vmatprep.subr.mxu0 0.0
    %529 = vmatpush1.msra.mxu0 0.0
    %530 = vmatprep.subr.mxu0 0.0
    %531 = vmatpush1.msra.mxu0 0.0
    %532 = vmatprep.mubr.f32.mxu0 0.0
    %v533 = vand.u32 %v48, 4294901760
    %v534 = vsub.f32 %v48, %v533
    %v535 = vand.u32 %v534, 4294901760
    %536 = vmatmul.mubr.f32.gmra.mrb[0].mxu0 %v535
    %v537 = vpop.f32.mrb[0].mxu0
    %v538 = vadd.f32 %v414, %v537
    %v539 = vpop.f32.mrb[0].mxu0
    %540 = vmatprep.mubr.f32.mxu0 0.0
    %v541 = vand.u32 %v51, 4294901760
    %v542 = vsub.f32 %v51, %v541
    %v543 = vand.u32 %v542, 4294901760
    %544 = vmatmul.mubr.f32.gmra.mrb[0].mxu0 %v543
    %v545 = vpop.f32.mrb[0].mxu0
    %v546 = vadd.f32 %v421, %v545
    %v547 = vpop.f32.mrb[0].mxu0
    %548 = vmatprep.mubr.f32.mxu0 0.0
    %v549 = vand.u32 %v54, 4294901760
    %v550 = vsub.f32 %v54, %v549
    %v551 = vand.u32 %v550, 4294901760
    %552 = vmatmul.mubr.f32.gmra.mrb[0].mxu0 %v551
    %v553 = vpop.f32.mrb[0].mxu0
    %v554 = vadd.f32 %v428, %v553
    %v555 = vpop.f32.mrb[0].mxu0
    %556 = vmatprep.mubr.f32.mxu0 0.0
    %v557 = vand.u32 %v57, 4294901760
    %v558 = vsub.f32 %v57, %v557
    %v559 = vand.u32 %v558, 4294901760
    %560 = vmatmul.mubr.f32.gmra.mrb[0].mxu0 %v559
    %v561 = vpop.f32.mrb[0].mxu0
    %v562 = vadd.f32 %v435, %v561
    %v563 = vpop.f32.mrb[0].mxu0
    %564 = vmatprep.mubr.f32.mxu0 0.0
    %v565 = vand.u32 %v60, 4294901760
    %v566 = vsub.f32 %v60, %v565
    %v567 = vand.u32 %v566, 4294901760
    %568 = vmatmul.mubr.f32.gmra.mrb[0].mxu0 %v567
    %v569 = vpop.f32.mrb[0].mxu0
    %v570 = vadd.f32 %v442, %v569
    %v571 = vpop.f32.mrb[0].mxu0
    %572 = vmatprep.mubr.f32.mxu0 0.0
    %v573 = vand.u32 %v63, 4294901760
    %v574 = vsub.f32 %v63, %v573
    %v575 = vand.u32 %v574, 4294901760
    %576 = vmatmul.mubr.f32.gmra.mrb[0].mxu0 %v575
    %v577 = vpop.f32.mrb[0].mxu0
    %v578 = vadd.f32 %v449, %v577
    %v579 = vpop.f32.mrb[0].mxu0
    %580 = vmatprep.mubr.f32.mxu0 0.0
    %v581 = vand.u32 %v66, 4294901760
    %v582 = vsub.f32 %v66, %v581
    %v583 = vand.u32 %v582, 4294901760
    %584 = vmatmul.mubr.f32.gmra.mrb[0].mxu0 %v583
    %v585 = vpop.f32.mrb[0].mxu0
    %v586 = vadd.f32 %v456, %v585
    %v587 = vpop.f32.mrb[0].mxu0
    %588 = vmatprep.mubr.f32.mxu0 0.0
    %v589 = vand.u32 %v69, 4294901760
    %v590 = vsub.f32 %v69, %v589
    %v591 = vand.u32 %v590, 4294901760
    %592 = vmatmul.mubr.f32.gmra.mrb[0].mxu0 %v591
    %v593 = vpop.f32.mrb[0].mxu0
    %v594 = vadd.f32 %v463, %v593
    %v595 = vpop.f32.mrb[0].mxu0
    %596 = vdwg.mxu0
    %597 = vmatprep.subr.mxu0 0.0
    %v598 = vand.u32 %v44, 4294901760
    %v599 = vsub.f32 %v44, %v598
    %v600 = vand.u32 %v599, 4294901760
    %601 = vmatpush1.msra.mxu0 %v600
    %602 = vmatprep.subr.mxu0 0.0
    %v603 = vand.u32 %v45, 4294901760
    %v604 = vsub.f32 %v45, %v603
    %v605 = vand.u32 %v604, 4294901760
    %606 = vmatpush1.msra.mxu0 %v605
    %607 = vmatprep.subr.mxu0 0.0
    %608 = vmatpush1.msra.mxu0 0.0
    %609 = vmatprep.subr.mxu0 0.0
    %610 = vmatpush1.msra.mxu0 0.0
    %611 = vmatprep.subr.mxu0 0.0
    %612 = vmatpush1.msra.mxu0 0.0
    %613 = vmatprep.subr.mxu0 0.0
    %614 = vmatpush1.msra.mxu0 0.0
    %615 = vmatprep.subr.mxu0 0.0
    %616 = vmatpush1.msra.mxu0 0.0
    %617 = vmatprep.subr.mxu0 0.0
    %618 = vmatpush1.msra.mxu0 0.0
    %619 = vmatprep.subr.mxu0 0.0
    %620 = vmatpush1.msra.mxu0 0.0
    %621 = vmatprep.subr.mxu0 0.0
    %622 = vmatpush1.msra.mxu0 0.0
    %623 = vmatprep.subr.mxu0 0.0
    %624 = vmatpush1.msra.mxu0 0.0
    %625 = vmatprep.subr.mxu0 0.0
    %626 = vmatpush1.msra.mxu0 0.0
    %627 = vmatprep.subr.mxu0 0.0
    %628 = vmatpush1.msra.mxu0 0.0
    %629 = vmatprep.subr.mxu0 0.0
    %630 = vmatpush1.msra.mxu0 0.0
    %631 = vmatprep.subr.mxu0 0.0
    %632 = vmatpush1.msra.mxu0 0.0
    %633 = vmatprep.subr.mxu0 0.0
    %634 = vmatpush1.msra.mxu0 0.0
    %635 = vmatprep.subr.mxu0 0.0
    %636 = vmatpush1.msra.mxu0 0.0
    %637 = vmatprep.subr.mxu0 0.0
    %638 = vmatpush1.msra.mxu0 0.0
    %639 = vmatprep.subr.mxu0 0.0
    %640 = vmatpush1.msra.mxu0 0.0
    %641 = vmatprep.subr.mxu0 0.0
    %642 = vmatpush1.msra.mxu0 0.0
    %643 = vmatprep.subr.mxu0 0.0
    %644 = vmatpush1.msra.mxu0 0.0
    %645 = vmatprep.subr.mxu0 0.0
    %646 = vmatpush1.msra.mxu0 0.0
    %647 = vmatprep.subr.mxu0 0.0
    %648 = vmatpush1.msra.mxu0 0.0
    %649 = vmatprep.subr.mxu0 0.0
    %650 = vmatpush1.msra.mxu0 0.0
    %651 = vmatprep.subr.mxu0 0.0
    %652 = vmatpush1.msra.mxu0 0.0
    %653 = vmatprep.subr.mxu0 0.0
    %654 = vmatpush1.msra.mxu0 0.0
    %655 = vmatprep.subr.mxu0 0.0
    %656 = vmatpush1.msra.mxu0 0.0
    %657 = vmatprep.subr.mxu0 0.0
    %658 = vmatpush1.msra.mxu0 0.0
    %659 = vmatprep.subr.mxu0 0.0
    %660 = vmatpush1.msra.mxu0 0.0
    %661 = vmatprep.subr.mxu0 0.0
    %662 = vmatpush1.msra.mxu0 0.0
    %663 = vmatprep.subr.mxu0 0.0
    %664 = vmatpush1.msra.mxu0 0.0
    %665 = vmatprep.subr.mxu0 0.0
    %666 = vmatpush1.msra.mxu0 0.0
    %667 = vmatprep.mubr.f32.mxu0 0.0
    %v668 = vand.u32 %v48, 4294901760
    %669 = vmatmul.mubr.f32.gmra.mrb[0].mxu0 %v668
    %v670 = vpop.f32.mrb[0].mxu0
    %v671 = vadd.f32 %v538, %v670
    %v672 = vpop.f32.mrb[0].mxu0
    %673 = vmatprep.mubr.f32.mxu0 0.0
    %v674 = vand.u32 %v51, 4294901760
    %675 = vmatmul.mubr.f32.gmra.mrb[0].mxu0 %v674
    %v676 = vpop.f32.mrb[0].mxu0
    %v677 = vadd.f32 %v546, %v676
    %v678 = vpop.f32.mrb[0].mxu0
    %679 = vmatprep.mubr.f32.mxu0 0.0
    %v680 = vand.u32 %v54, 4294901760
    %681 = vmatmul.mubr.f32.gmra.mrb[0].mxu0 %v680
    %v682 = vpop.f32.mrb[0].mxu0
    %v683 = vadd.f32 %v554, %v682
    %v684 = vpop.f32.mrb[0].mxu0
    %685 = vmatprep.mubr.f32.mxu0 0.0
    %v686 = vand.u32 %v57, 4294901760
    %687 = vmatmul.mubr.f32.gmra.mrb[0].mxu0 %v686
    %v688 = vpop.f32.mrb[0].mxu0
    %v689 = vadd.f32 %v562, %v688
    %v690 = vpop.f32.mrb[0].mxu0
    %691 = vmatprep.mubr.f32.mxu0 0.0
    %v692 = vand.u32 %v60, 4294901760
    %693 = vmatmul.mubr.f32.gmra.mrb[0].mxu0 %v692
    %v694 = vpop.f32.mrb[0].mxu0
    %v695 = vadd.f32 %v570, %v694
    %v696 = vpop.f32.mrb[0].mxu0
    %697 = vmatprep.mubr.f32.mxu0 0.0
    %v698 = vand.u32 %v63, 4294901760
    %699 = vmatmul.mubr.f32.gmra.mrb[0].mxu0 %v698
    %v700 = vpop.f32.mrb[0].mxu0
    %v701 = vadd.f32 %v578, %v700
    %v702 = vpop.f32.mrb[0].mxu0
    %703 = vmatprep.mubr.f32.mxu0 0.0
    %v704 = vand.u32 %v66, 4294901760
    %705 = vmatmul.mubr.f32.gmra.mrb[0].mxu0 %v704
    %v706 = vpop.f32.mrb[0].mxu0
    %v707 = vadd.f32 %v586, %v706
    %v708 = vpop.f32.mrb[0].mxu0
    %709 = vmatprep.mubr.f32.mxu0 0.0
    %v710 = vand.u32 %v69, 4294901760
    %711 = vmatmul.mubr.f32.gmra.mrb[0].mxu0 %v710
    %v712 = vpop.f32.mrb[0].mxu0
    %v713 = vadd.f32 %v594, %v712
    %v714 = vpop.f32.mrb[0].mxu0
    %715 = vdwg.mxu0
    %716 = vmatprep.subr.mxu0 0.0
    %v717 = vand.u32 %v44, 4294901760
    %718 = vmatpush1.msra.mxu0 %v717
    %719 = vmatprep.subr.mxu0 0.0
    %v720 = vand.u32 %v45, 4294901760
    %721 = vmatpush1.msra.mxu0 %v720
    %722 = vmatprep.subr.mxu0 0.0
    %723 = vmatpush1.msra.mxu0 0.0
    %724 = vmatprep.subr.mxu0 0.0
    %725 = vmatpush1.msra.mxu0 0.0
    %726 = vmatprep.subr.mxu0 0.0
    %727 = vmatpush1.msra.mxu0 0.0
    %728 = vmatprep.subr.mxu0 0.0
    %729 = vmatpush1.msra.mxu0 0.0
    %730 = vmatprep.subr.mxu0 0.0
    %731 = vmatpush1.msra.mxu0 0.0
    %732 = vmatprep.subr.mxu0 0.0
    %733 = vmatpush1.msra.mxu0 0.0
    %734 = vmatprep.subr.mxu0 0.0
    %735 = vmatpush1.msra.mxu0 0.0
    %736 = vmatprep.subr.mxu0 0.0
    %737 = vmatpush1.msra.mxu0 0.0
    %738 = vmatprep.subr.mxu0 0.0
    %739 = vmatpush1.msra.mxu0 0.0
    %740 = vmatprep.subr.mxu0 0.0
    %741 = vmatpush1.msra.mxu0 0.0
    %742 = vmatprep.subr.mxu0 0.0
    %743 = vmatpush1.msra.mxu0 0.0
    %744 = vmatprep.subr.mxu0 0.0
    %745 = vmatpush1.msra.mxu0 0.0
    %746 = vmatprep.subr.mxu0 0.0
    %747 = vmatpush1.msra.mxu0 0.0
    %748 = vmatprep.subr.mxu0 0.0
    %749 = vmatpush1.msra.mxu0 0.0
    %750 = vmatprep.subr.mxu0 0.0
    %751 = vmatpush1.msra.mxu0 0.0
    %752 = vmatprep.subr.mxu0 0.0
    %753 = vmatpush1.msra.mxu0 0.0
    %754 = vmatprep.subr.mxu0 0.0
    %755 = vmatpush1.msra.mxu0 0.0
    %756 = vmatprep.subr.mxu0 0.0
    %757 = vmatpush1.msra.mxu0 0.0
    %758 = vmatprep.subr.mxu0 0.0
    %759 = vmatpush1.msra.mxu0 0.0
    %760 = vmatprep.subr.mxu0 0.0
    %761 = vmatpush1.msra.mxu0 0.0
    %762 = vmatprep.subr.mxu0 0.0
    %763 = vmatpush1.msra.mxu0 0.0
    %764 = vmatprep.subr.mxu0 0.0
    %765 = vmatpush1.msra.mxu0 0.0
    %766 = vmatprep.subr.mxu0 0.0
    %767 = vmatpush1.msra.mxu0 0.0
    %768 = vmatprep.subr.mxu0 0.0
    %769 = vmatpush1.msra.mxu0 0.0
    %770 = vmatprep.subr.mxu0 0.0
    %771 = vmatpush1.msra.mxu0 0.0
    %772 = vmatprep.subr.mxu0 0.0
    %773 = vmatpush1.msra.mxu0 0.0
    %774 = vmatprep.subr.mxu0 0.0
    %775 = vmatpush1.msra.mxu0 0.0
    %776 = vmatprep.subr.mxu0 0.0
    %777 = vmatpush1.msra.mxu0 0.0
    %778 = vmatprep.subr.mxu0 0.0
    %779 = vmatpush1.msra.mxu0 0.0
    %780 = vmatprep.subr.mxu0 0.0
    %781 = vmatpush1.msra.mxu0 0.0
    %782 = vmatprep.mubr.f32.mxu0 0.0
    %v783 = vand.u32 %v48, 4294901760
    %784 = vmatmul.mubr.f32.gmra.mrb[0].mxu0 %v783
    %v785 = vpop.f32.mrb[0].mxu0
    %v786 = vadd.f32 %v671, %v785
    %v787 = vpop.f32.mrb[0].mxu0
    %788 = vmatprep.mubr.f32.mxu0 0.0
    %v789 = vand.u32 %v51, 4294901760
    %790 = vmatmul.mubr.f32.gmra.mrb[0].mxu0 %v789
    %v791 = vpop.f32.mrb[0].mxu0
    %v792 = vadd.f32 %v677, %v791
    %v793 = vpop.f32.mrb[0].mxu0
    %794 = vmatprep.mubr.f32.mxu0 0.0
    %v795 = vand.u32 %v54, 4294901760
    %796 = vmatmul.mubr.f32.gmra.mrb[0].mxu0 %v795
    %v797 = vpop.f32.mrb[0].mxu0
    %v798 = vadd.f32 %v683, %v797
    %v799 = vpop.f32.mrb[0].mxu0
    %800 = vmatprep.mubr.f32.mxu0 0.0
    %v801 = vand.u32 %v57, 4294901760
    %802 = vmatmul.mubr.f32.gmra.mrb[0].mxu0 %v801
    %v803 = vpop.f32.mrb[0].mxu0
    %v804 = vadd.f32 %v689, %v803
    %v805 = vpop.f32.mrb[0].mxu0
    %806 = vmatprep.mubr.f32.mxu0 0.0
    %v807 = vand.u32 %v60, 4294901760
    %808 = vmatmul.mubr.f32.gmra.mrb[0].mxu0 %v807
    %v809 = vpop.f32.mrb[0].mxu0
    %v810 = vadd.f32 %v695, %v809
    %v811 = vpop.f32.mrb[0].mxu0
    %812 = vmatprep.mubr.f32.mxu0 0.0
    %v813 = vand.u32 %v63, 4294901760
    %814 = vmatmul.mubr.f32.gmra.mrb[0].mxu0 %v813
    %v815 = vpop.f32.mrb[0].mxu0
    %v816 = vadd.f32 %v701, %v815
    %v817 = vpop.f32.mrb[0].mxu0
    %818 = vmatprep.mubr.f32.mxu0 0.0
    %v819 = vand.u32 %v66, 4294901760
    %820 = vmatmul.mubr.f32.gmra.mrb[0].mxu0 %v819
    %v821 = vpop.f32.mrb[0].mxu0
    %v822 = vadd.f32 %v707, %v821
    %v823 = vpop.f32.mrb[0].mxu0
    %824 = vmatprep.mubr.f32.mxu0 0.0
    %v825 = vand.u32 %v69, 4294901760
    %826 = vmatmul.mubr.f32.gmra.mrb[0].mxu0 %v825
    %v827 = vpop.f32.mrb[0].mxu0
    %v828 = vadd.f32 %v713, %v827
    %v829 = vpop.f32.mrb[0].mxu0
    %830 = vdwg.mxu0
    %s831 = scalar_lea.vmem [#allocation5], 16
    %832 = vst.msk [vmem:[%s831] sm:$0xff] %vm26, %v786
    %833 = vst.msk [vmem:[%s831 + $0x8] sm:$0xff] %vm26, %v792
    %834 = vst.msk [vmem:[%s831 + $0x10] sm:$0xff] %vm26, %v798
    %835 = vst.msk [vmem:[%s831 + $0x18] sm:$0xff] %vm26, %v804
    %836 = vst.msk [vmem:[%s831 + $0x40] sm:$0xff] %vm26, %v810
    %837 = vst.msk [vmem:[%s831 + $0x48] sm:$0xff] %vm26, %v816
    %838 = vst.msk [vmem:[%s831 + $0x50] sm:$0xff] %vm26, %v822
    %839 = vst.msk [vmem:[%s831 + $0x58] sm:$0xff] %vm26, %v828
    // Predicated region
    $region14: #{tpu_custom_call.1} parent=1 // pred_check
      _
    $region15: #{tpu_custom_call.1} parent=1 // pred_check_branch
      %841 = sbr.rel (0) target = $region17
    $region16: #{tpu_custom_call.1} parent=1 // pred_region
      %s843 = ssub.s32 2048, 2048
      %844 = vsyncadd [#allocation4], %s843
      %s845 = sshll.u32 [#allocation5], 4
      %s846 = int_to_ptr.vmem [resolvable:$true] %s845
      %851 = dma.vmem_to_hbm [thread:$0]  %s846, 2048, %s2, [#allocation4], 128, 128, 8
    $region17: #{tpu_custom_call.1} parent=1 // pred_fallthru
      _
    // Predicated region
    $region18: #{tpu_custom_call.1} parent=1 // pred_check
      _
    $region19: #{tpu_custom_call.1} parent=1 // pred_check_branch
      %853 = sbr.rel (0) target = $region21
    $region20: #{tpu_custom_call.1} parent=1 // pred_region
      %854 = dma.done [#allocation4], 2048
    $region21: #{tpu_custom_call.1} parent=1 // pred_fallthru
      _
    %855 = vsyncpa [#allocation3], 1
    %856 = vsyncpa [#allocation4], 1

</llo_original>
